<compile_context>
chip_gen: v7x
topology: tpu7x:2x2x1
jax: 0.10.0
libtpu: 0.0.40
codegen_flags: <defaults>
</compile_context>

<pallas_src>
import functools

import jax
import jax.numpy as jnp
import numpy as np
from jax.experimental import pallas as pl
from jax.experimental.pallas import tpu as pltpu


# --------------------------------------------------------------------------
# shared in-kernel helpers
# --------------------------------------------------------------------------
def _spatial_gate(x, wconv_col, *, fold_g, num_ch):
    """sigmoid(1x1 conv over channels).

    x: (Cg, T) f32, wconv_col: (Cg, 1) f32.
    Returns (Cg, T) when fold_g > 1 (each folded row already holds the gate
    for its own spatial positions), else (1, T) (broadcasts over channels).
    """
    if fold_g == 1 and num_ch >= 64:
        # Wide channel counts: cross-channel reduce on the otherwise idle MXU.
        s = jax.lax.dot_general(wconv_col, x, (((0,), (0,)), ((), ())),
                                preferred_element_type=jnp.float32)      # (1, T)
        return jax.nn.sigmoid(s)
    weighted = wconv_col * x                                             # (Cg, T)
    if fold_g > 1:
        # g-strided circular sublane reduce: after log2(C) roll-doublings,
        # row r holds sum_c weighted[(r mod g) + c*g].  Requires C a power
        # of two and C*g == 8 (guaranteed by the wrapper's fold condition).
        acc = weighted
        shift = fold_g
        for _ in range(num_ch.bit_length() - 1):
            acc = acc + pltpu.roll(acc, shift=shift, axis=0)
            shift *= 2
        return jax.nn.sigmoid(acc)                                       # (Cg, T)
    return jax.nn.sigmoid(jnp.sum(weighted, axis=0, keepdims=True))      # (1, T)


# --------------------------------------------------------------------------
# fused single-pass kernel (whole image per grid step)
# --------------------------------------------------------------------------
def _fused_kernel(x_ref, wconv_ref, w1t_ref, b1_ref, w2_ref, b2_ref, o_ref, *,
                  inv_hw, fold_g, num_ch):
    """x_ref/o_ref: (1, Cg, HWg); wconv: (Cg,1); w1t,w2: (Cg,Cr); b1: (1,Cr);
    b2: (Cg,1).  Weight rows are pre-repeated fold_g times in the wrapper."""
    x = x_ref[0].astype(jnp.float32)                                     # (Cg, HWg)

    # Channel gate ca = sigmoid(W2 relu(W1 mean_hw|x| + b1) + b2), off-MXU.
    mean_part = jnp.sum(jnp.abs(x), axis=-1, keepdims=True) * inv_hw     # (Cg, 1)
    h1 = jnp.sum(w1t_ref[...] * mean_part, axis=0, keepdims=True) + b1_ref[...]
    h1 = jnp.maximum(h1, 0.0)                                            # (1, Cr)
    ca = jax.nn.sigmoid(jnp.sum(w2_ref[...] * h1, axis=-1, keepdims=True)
                        + b2_ref[...])                                   # (Cg, 1)

    # Spatial gate.
    sa = _spatial_gate(x, wconv_ref[...], fold_g=fold_g, num_ch=num_ch)

    # max(sa*x, ca*x) == torch.max(inputs_s, inputs_c); 3 VALU ops / element.
    o_ref[0] = jnp.maximum(sa * x, ca * x).astype(o_ref.dtype)


# --------------------------------------------------------------------------
# fallback two-pass kernels (large images)
# --------------------------------------------------------------------------
def _abs_rowsum_kernel(x_ref, s_ref, *, hw_folded):
    """Pass 1: accumulate per-row sum(|x|) across spatial tiles."""
    t = pl.program_id(1)

    @pl.when(t == 0)
    def _init():
        s_ref[...] = jnp.zeros_like(s_ref)

    x = x_ref[0].astype(jnp.float32)                                     # (Cg, T)
    # The last tile may be partial; Pallas does NOT zero the OOB region of an
    # input block, so mask lanes past the true extent before reducing.
    lane = jax.lax.broadcasted_iota(jnp.int32, x.shape, 1)
    valid = lane < (hw_folded - t * x.shape[-1])
    s_ref[0] = s_ref[0] + jnp.sum(jnp.where(valid, jnp.abs(x), 0.0),
                                  axis=-1, keepdims=True)


def _apply_kernel(x_ref, wconv_ref, ca_ref, o_ref, *, fold_g, num_ch):
    """Pass 2: apply spatial + channel gates to one (Cg, T) tile."""
    x = x_ref[0].astype(jnp.float32)                                     # (Cg, T)
    sa = _spatial_gate(x, wconv_ref[...], fold_g=fold_g, num_ch=num_ch)
    ca = ca_ref[0]                                                       # (Cg, 1)
    # OOB lanes of a partial last tile hold garbage, but Pallas masks their
    # writes on the partial output block, so no in-kernel mask is needed.
    o_ref[0] = jnp.maximum(sa * x, ca * x).astype(o_ref.dtype)


# --------------------------------------------------------------------------
# wrapper
# --------------------------------------------------------------------------
def attention_block(x, w_conv, w1, b1, w2, b2, *, max_block_bytes=4 << 20):
    """x: (B, C, H, W).  Returns (B, C, H, W) in x.dtype."""
    B, C, H, W = x.shape
    HW = H * W
    Cr = w1.shape[0]
    io_dtype = x.dtype
    f32 = jnp.float32

    # Sublane fold: if C doesn't fill the 8 f32 sublanes, fold g spatial
    # chunks into the channel axis.  (B,C,HW)->(B,C*g,HW/g) is a free reshape.
    g = 1
    if C < 8 and (C & (C - 1)) == 0 and 8 % C == 0 and HW % (8 // C) == 0:
        g = 8 // C
    Cg, HWg = C * g, HW // g

    x_flat = x.reshape(B, Cg, HWg)                # free: collapse/split trailing dims
    wconv_col = jnp.repeat(w_conv.reshape(C, 1).astype(f32), g, axis=0)   # (Cg, 1)

    def _params(sem):
        return pltpu.CompilerParams(dimension_semantics=sem,
                                    vmem_limit_bytes=48 << 20)

    # ---------------- fused single-pass path --------------------------------
    if C * HW * 4 <= max_block_bytes:            # f32 compute footprint per image
        # TODO(synk): if B == 1 on a 2-TC chip (v7x) this grid serializes onto
        # one core; splitting HW into two parallel halves would recover it.
        w1t = jnp.repeat(w1.astype(f32).T, g, axis=0)                    # (Cg, Cr)
        b1_row = b1.reshape(1, Cr).astype(f32)                           # (1, Cr)
        w2f = jnp.repeat(w2.astype(f32), g, axis=0)                      # (Cg, Cr)
        b2_col = jnp.repeat(b2.reshape(C, 1).astype(f32), g, axis=0)     # (Cg, 1)

        out_flat = pl.pallas_call(
            functools.partial(_fused_kernel, inv_hw=float(1.0 / HW),
                              fold_g=g, num_ch=C),
            out_shape=jax.ShapeDtypeStruct((B, Cg, HWg), io_dtype),
            grid_spec=pltpu.PrefetchScalarGridSpec(
                num_scalar_prefetch=0,
                grid=(B,),
                in_specs=[
                    pl.BlockSpec((1, Cg, HWg), lambda b: (b, 0, 0)),   # x (whole image)
                    pl.BlockSpec((Cg, 1), lambda b: (0, 0)),           # conv weight
                    pl.BlockSpec((Cg, Cr), lambda b: (0, 0)),          # fc1 weight (T, folded)
                    pl.BlockSpec((1, Cr), lambda b: (0, 0)),           # fc1 bias
                    pl.BlockSpec((Cg, Cr), lambda b: (0, 0)),          # fc2 weight (folded)
                    pl.BlockSpec((Cg, 1), lambda b: (0, 0)),           # fc2 bias (folded)
                ],
                out_specs=pl.BlockSpec((1, Cg, HWg), lambda b: (b, 0, 0)),
            ),
            compiler_params=_params(("parallel",)),
        )(x_flat, wconv_col, w1t, b1_row, w2f, b2_col)
        return out_flat.reshape(B, C, H, W)

    # ---------------- fallback: two passes over lane-dense tiles ------------
    T = max(128, (max_block_bytes // (Cg * 4)) // 128 * 128)
    if T >= HWg:
        T = HWg                                   # full extent -> always legal block
    n_tiles = pl.cdiv(HWg, T)

    # pass 1: per-row sum(|x|) with a resident (1, Cg, 1) accumulator.
    rowsum = pl.pallas_call(
        functools.partial(_abs_rowsum_kernel, hw_folded=HWg),
        out_shape=jax.ShapeDtypeStruct((B, Cg, 1), jnp.float32),
        grid_spec=pltpu.PrefetchScalarGridSpec(
            num_scalar_prefetch=0,
            grid=(B, n_tiles),
            in_specs=[pl.BlockSpec((1, Cg, T), lambda b, t: (b, 0, t))],
            out_specs=pl.BlockSpec((1, Cg, 1), lambda b, t: (b, 0, 0)),
        ),
        compiler_params=_params(("parallel", "arbitrary")),
    )(x_flat)

    # Tiny (B, C)-sized channel-MLP in plain JAX: keeps the 4 weight operands
    # and the under-utilized N=1 matmuls out of the hot kernels.
    mean = rowsum.reshape(B, C, g).sum(axis=-1) * (1.0 / HW)              # (B, C)
    h1 = jnp.maximum(mean @ w1.astype(f32).T + b1.astype(f32), 0.0)
    ca = jax.nn.sigmoid(h1 @ w2.astype(f32).T + b2.astype(f32))           # (B, C)
    ca_col = jnp.repeat(ca, g, axis=1)[:, :, None]                        # (B, Cg, 1)

    # pass 2: apply spatial + channel gates per tile.
    out_flat = pl.pallas_call(
        functools.partial(_apply_kernel, fold_g=g, num_ch=C),
        out_shape=jax.ShapeDtypeStruct((B, Cg, HWg), io_dtype),
        grid_spec=pltpu.PrefetchScalarGridSpec(
            num_scalar_prefetch=0,
            grid=(B, n_tiles),
            in_specs=[
                pl.BlockSpec((1, Cg, T), lambda b, t: (b, 0, t)),      # x tile
                pl.BlockSpec((Cg, 1), lambda b, t: (0, 0)),            # conv weight
                pl.BlockSpec((1, Cg, 1), lambda b, t: (b, 0, 0)),      # channel gate
            ],
            out_specs=pl.BlockSpec((1, Cg, T), lambda b, t: (b, 0, t)),
        ),
        compiler_params=_params(("parallel", "parallel")),
    )(x_flat, wconv_col, ca_col)
    return out_flat.reshape(B, C, H, W)


# --------------------------------------------------------------------------
# pure-JAX reference mirroring the PyTorch forward (f32)
# --------------------------------------------------------------------------
def attention_block_ref(x, w_conv, w1, b1, w2, b2):
    B, C, H, W = x.shape
    sa = jnp.einsum("bchw,c->bhw", x, w_conv.reshape(C))[:, None]         # (B,1,H,W)
    sa = jax.nn.sigmoid(sa)
    inputs_s = sa * x
    ca = jnp.mean(jnp.abs(x).reshape(B, C, -1), axis=2)                   # (B,C)
    ca = jnp.maximum(ca @ w1.T + b1, 0.0)
    ca = jax.nn.sigmoid(ca @ w2.T + b2).reshape(B, C, 1, 1)
    inputs_c = ca * x
    return jnp.maximum(inputs_s, inputs_c)


# --------------------------------------------------------------------------
# tests
# --------------------------------------------------------------------------
def _run_case(B, C, H, W, r, tol, *, max_block_bytes=4 << 20):
    Cr = max(C // r, 1)
    key = jax.random.PRNGKey(0)
    kx, kc, k1, kb1, k2, kb2 = jax.random.split(key, 6)

    x = jax.random.normal(kx, (B, C, H, W), dtype=jnp.float32)
    w_conv = jax.random.normal(kc, (1, C, 1, 1), dtype=jnp.float32) * 0.5
    w1 = jax.random.normal(k1, (Cr, C), dtype=jnp.float32) * 0.5
    b1 = jax.random.normal(kb1, (Cr,), dtype=jnp.float32) * 0.1
    w2 = jax.random.normal(k2, (C, Cr), dtype=jnp.float32) * 0.5
    b2 = jax.random.normal(kb2, (C,), dtype=jnp.float32) * 0.1

    out = jax.block_until_ready(
        attention_block(x, w_conv, w1, b1, w2, b2,
                        max_block_bytes=max_block_bytes))
    ref = jax.block_until_ready(attention_block_ref(x, w_conv, w1, b1, w2, b2))
    np.testing.assert_allclose(np.asarray(out), np.asarray(ref),
                               rtol=tol, atol=tol)


if __name__ == "__main__":
    # Base module shape (C=4, r=2): fused single-pass, sublane fold g=2.
    _run_case(2, 4, 16, 16, 2, 1e-5)
    # Wider channels (C=8): fused single-pass, no fold, full-sublane reduce.
    _run_case(2, 8, 40, 40, 2, 1e-5)
    # Non-power-of-two channel count: plain cross-sublane reduce path.
    _run_case(2, 6, 16, 16, 2, 1e-5)
    # Force the two-pass tiled fallback (partial last tile + lane masking).
    _run_case(2, 4, 40, 40, 2, 1e-5, max_block_bytes=8 * 1024)
    print("KERNEL_OK")
</pallas_src>

<mosaic_0001>
module attributes {stable_mosaic.version = 11 : i64} {
  func.func @_fused_kernel(%arg0: i32, %arg1: memref<1x8x128xf32, #tpu.memory_space<vmem>>, %arg2: memref<8x1xf32, #tpu.memory_space<vmem>>, %arg3: memref<8x2xf32, #tpu.memory_space<vmem>>, %arg4: memref<1x2xf32, #tpu.memory_space<vmem>>, %arg5: memref<8x2xf32, #tpu.memory_space<vmem>>, %arg6: memref<8x1xf32, #tpu.memory_space<vmem>>, %arg7: memref<1x8x128xf32, #tpu.memory_space<vmem>>) attributes {dimension_semantics = [#tpu.dimension_semantics<parallel>], iteration_bounds = array<i64: 2>, scalar_prefetch = 0 : i64, scratch_operands = 0 : i64, tpu.core_type = #tpu.core_type<tc>, window_params = [{transform_indices = @transform_0, window_bounds = array<i64: 1, 8, 128>}, {pipeline_mode = #tpu.pipeline_mode<synchronous>, transform_indices = @transform_1, window_bounds = array<i64: 8, 1>}, {pipeline_mode = #tpu.pipeline_mode<synchronous>, transform_indices = @transform_2, window_bounds = array<i64: 8, 2>}, {pipeline_mode = #tpu.pipeline_mode<synchronous>, transform_indices = @transform_3, window_bounds = array<i64: 1, 2>}, {pipeline_mode = #tpu.pipeline_mode<synchronous>, transform_indices = @transform_4, window_bounds = array<i64: 8, 2>}, {pipeline_mode = #tpu.pipeline_mode<synchronous>, transform_indices = @transform_5, window_bounds = array<i64: 8, 1>}, {transform_indices = @transform_6, window_bounds = array<i64: 1, 8, 128>}]} {
    %c0 = arith.constant 0 : index
    %c0_0 = arith.constant 0 : index
    %c0_1 = arith.constant 0 : index
    %0 = vector.load %arg1[%c0, %c0_0, %c0_1] : memref<1x8x128xf32, #tpu.memory_space<vmem>>, vector<1x8x128xf32>
    %1 = vector.shape_cast %0 : vector<1x8x128xf32> to vector<8x128xf32>
    %2 = math.absf %1 : vector<8x128xf32>
    %cst = arith.constant dense<0.000000e+00> : vector<8xf32>
    %3 = vector.multi_reduction <add>, %2, %cst [1] : vector<8x128xf32> to vector<8xf32>
    %4 = vector.shape_cast %3 : vector<8xf32> to vector<8x1xf32>
    %cst_2 = arith.constant 3.906250e-03 : f32
    %5 = vector.broadcast %cst_2 : f32 to vector<8x1xf32>
    %6 = arith.mulf %4, %5 : vector<8x1xf32>
    %c0_3 = arith.constant 0 : index
    %c0_4 = arith.constant 0 : index
    %7 = vector.load %arg3[%c0_3, %c0_4] : memref<8x2xf32, #tpu.memory_space<vmem>>, vector<8x2xf32>
    %8 = vector.broadcast %6 : vector<8x1xf32> to vector<8x2xf32>
    %9 = arith.mulf %7, %8 : vector<8x2xf32>
    %cst_5 = arith.constant dense<0.000000e+00> : vector<2xf32>
    %10 = vector.multi_reduction <add>, %9, %cst_5 [0] : vector<8x2xf32> to vector<2xf32>
    %11 = vector.shape_cast %10 : vector<2xf32> to vector<1x2xf32>
    %c0_6 = arith.constant 0 : index
    %c0_7 = arith.constant 0 : index
    %12 = vector.load %arg4[%c0_6, %c0_7] : memref<1x2xf32, #tpu.memory_space<vmem>>, vector<1x2xf32>
    %13 = arith.addf %11, %12 : vector<1x2xf32>
    %cst_8 = arith.constant 0.000000e+00 : f32
    %14 = vector.broadcast %cst_8 : f32 to vector<1x2xf32>
    %15 = arith.maximumf %13, %14 : vector<1x2xf32>
    %c0_9 = arith.constant 0 : index
    %c0_10 = arith.constant 0 : index
    %16 = vector.load %arg5[%c0_9, %c0_10] : memref<8x2xf32, #tpu.memory_space<vmem>>, vector<8x2xf32>
    %17 = vector.broadcast %15 : vector<1x2xf32> to vector<8x2xf32>
    %18 = arith.mulf %16, %17 : vector<8x2xf32>
    %cst_11 = arith.constant dense<0.000000e+00> : vector<8xf32>
    %19 = vector.multi_reduction <add>, %18, %cst_11 [1] : vector<8x2xf32> to vector<8xf32>
    %20 = vector.shape_cast %19 : vector<8xf32> to vector<8x1xf32>
    %c0_12 = arith.constant 0 : index
    %c0_13 = arith.constant 0 : index
    %21 = vector.load %arg6[%c0_12, %c0_13] : memref<8x1xf32, #tpu.memory_space<vmem>>, vector<8x1xf32>
    %22 = arith.addf %20, %21 : vector<8x1xf32>
    %23 = arith.negf %22 : vector<8x1xf32>
    %24 = math.exp %23 : vector<8x1xf32>
    %cst_14 = arith.constant 1.000000e+00 : f32
    %25 = vector.broadcast %cst_14 : f32 to vector<8x1xf32>
    %26 = arith.addf %25, %24 : vector<8x1xf32>
    %27 = arith.divf %25, %26 : vector<8x1xf32>
    %c0_15 = arith.constant 0 : index
    %c0_16 = arith.constant 0 : index
    %28 = vector.load %arg2[%c0_15, %c0_16] : memref<8x1xf32, #tpu.memory_space<vmem>>, vector<8x1xf32>
    %29 = vector.broadcast %28 : vector<8x1xf32> to vector<8x128xf32>
    %30 = arith.mulf %29, %1 : vector<8x128xf32>
    %c2_i32 = arith.constant 2 : i32
    %31 = tpu.dynamic_rotate %30 by %c2_i32 dim 0 : vector<8x128xf32>, i32 -> vector<8x128xf32>
    %32 = arith.addf %30, %31 : vector<8x128xf32>
    %c4_i32 = arith.constant 4 : i32
    %33 = tpu.dynamic_rotate %32 by %c4_i32 dim 0 : vector<8x128xf32>, i32 -> vector<8x128xf32>
    %34 = arith.addf %32, %33 : vector<8x128xf32>
    %35 = arith.negf %34 : vector<8x128xf32>
    %36 = math.exp %35 : vector<8x128xf32>
    %cst_17 = arith.constant 1.000000e+00 : f32
    %37 = vector.broadcast %cst_17 : f32 to vector<8x128xf32>
    %38 = arith.addf %37, %36 : vector<8x128xf32>
    %39 = arith.divf %37, %38 : vector<8x128xf32>
    %40 = arith.mulf %39, %1 : vector<8x128xf32>
    %41 = vector.broadcast %27 : vector<8x1xf32> to vector<8x128xf32>
    %42 = arith.mulf %41, %1 : vector<8x128xf32>
    %43 = arith.maximumf %40, %42 : vector<8x128xf32>
    %c0_18 = arith.constant 0 : index
    %c0_19 = arith.constant 0 : index
    %c0_20 = arith.constant 0 : index
    %44 = vector.load %arg7[%c0_18, %c0_19, %c0_20] : memref<1x8x128xf32, #tpu.memory_space<vmem>>, vector<1x8x128xf32>
    %45 = vector.shape_cast %44 : vector<1x8x128xf32> to vector<8x128xf32>
    %46 = vector.shape_cast %43 : vector<8x128xf32> to vector<1x8x128xf32>
    tpu.vector_store %arg7[%c0_18, %c0_19, %c0_20], %46 {strides = array<i32>} : memref<1x8x128xf32, #tpu.memory_space<vmem>>, vector<1x8x128xf32>,
    return
  }
  func.func @transform_0(%arg0: i32) -> (i32, i32, i32) {
    %c0_i32 = arith.constant 0 : i32
    %c0_i32_0 = arith.constant 0 : i32
    %c0_i32_1 = arith.constant 0 : i32
    return %arg0, %c0_i32, %c0_i32_0 : i32, i32, i32
  }
  func.func @transform_1(%arg0: i32) -> (i32, i32) {
    %c0_i32 = arith.constant 0 : i32
    %c0_i32_0 = arith.constant 0 : i32
    %c0_i32_1 = arith.constant 0 : i32
    return %c0_i32, %c0_i32_0 : i32, i32
  }
  func.func @transform_2(%arg0: i32) -> (i32, i32) {
    %c0_i32 = arith.constant 0 : i32
    %c0_i32_0 = arith.constant 0 : i32
    %c0_i32_1 = arith.constant 0 : i32
    return %c0_i32, %c0_i32_0 : i32, i32
  }
  func.func @transform_3(%arg0: i32) -> (i32, i32) {
    %c0_i32 = arith.constant 0 : i32
    %c0_i32_0 = arith.constant 0 : i32
    %c0_i32_1 = arith.constant 0 : i32
    return %c0_i32, %c0_i32_0 : i32, i32
  }
  func.func @transform_4(%arg0: i32) -> (i32, i32) {
    %c0_i32 = arith.constant 0 : i32
    %c0_i32_0 = arith.constant 0 : i32
    %c0_i32_1 = arith.constant 0 : i32
    return %c0_i32, %c0_i32_0 : i32, i32
  }
  func.func @transform_5(%arg0: i32) -> (i32, i32) {
    %c0_i32 = arith.constant 0 : i32
    %c0_i32_0 = arith.constant 0 : i32
    %c0_i32_1 = arith.constant 0 : i32
    return %c0_i32, %c0_i32_0 : i32, i32
  }
  func.func @transform_6(%arg0: i32) -> (i32, i32, i32) {
    %c0_i32 = arith.constant 0 : i32
    %c0_i32_0 = arith.constant 0 : i32
    %c0_i32_1 = arith.constant 0 : i32
    return %arg0, %c0_i32, %c0_i32_0 : i32, i32, i32
  }
}

</mosaic_0001>

<llo_original>
// kernel: tpu_custom_call.1
$region0: #{tpu_custom_call.1}
  #allocation0 [shape = 'u32[]', space=smem, size = 0x4, offset = 0x4, fixed_abs, tag = 'smem constant byte address 0x4 - core index']
  #allocation1 [shape = 'u32[144,128]{1,0:T(1,128)}', space=vmem, size = 0x12000, scoped, tag = 'internal scratch']
  %s0 = inlined_call_operand.vmem [shape: f32[2,8,128], index: 0, kind: input, shape index: {}]
  %s1 = inlined_call_operand.vmem [shape: f32[8,1], index: 1, kind: input, shape index: {}]
  %s2 = inlined_call_operand.vmem [shape: f32[8,2], index: 2, kind: input, shape index: {}]
  %s3 = inlined_call_operand.vmem [shape: f32[1,2], index: 3, kind: input, shape index: {}]
  %s4 = inlined_call_operand.vmem [shape: f32[8,2], index: 4, kind: input, shape index: {}]
  %s5 = inlined_call_operand.vmem [shape: f32[8,1], index: 5, kind: input, shape index: {}]
  %s6 = inlined_call_operand.hbm [shape: f32[2,8,128], index: 6, kind: output, shape index: {}]
  %s7 = sld [smem:[#allocation0]]
  $region57: #{tpu_custom_call.1} parent=0
    _
  %s9 = ssub.s32 1, %s7
  %s10 = scalar_select 0, %s9, %s7
  $region1: #{tpu_custom_call.1} parent=0
    #allocation2 [shape = 'u8[8192]{0}', space=vmem, size = 0x2000, scoped, tag = 'output window, operand 0']
    #allocation3 [shape = 's32[2]{0}', space=sflag, size = 0x8, scoped, tag = 'scoped memory for tpu_custom_call.1']
    %11 = vsyncpa [#allocation3], 0
    %s12 = scalar_lea.sflag [#allocation3], 1
    %13 = vsyncpa %s12, 0
    loop: start=0, step=1, limit=4
    $region2: #{tpu_custom_call.1} parent=1 // loop_pre_header
      _
    $region3: #{tpu_custom_call.1} parent=1 // loop_header
      %s15 = sphi 0, %s19
      %p16 = scmp.ge.s32.totalorder %s15, 4
      %s25 = sphi 0, %s27
      %s28 = sphi 0, %s25
      %s29 = sphi 0, %s28
      %s45 = sphi 0, %s29
      %s49 = sphi 0, %s49
      %s51 = sphi 0, %s49
      %s52 = sphi 0, %s51
      %s66 = sphi 0, %s52
      %s70 = sphi 0, %s70
      %s72 = sphi 0, %s70
      %s73 = sphi 0, %s72
      %s87 = sphi 0, %s73
      %s91 = sphi 0, %s91
      %s93 = sphi 0, %s91
      %s94 = sphi 0, %s93
      %s108 = sphi 0, %s94
      %s112 = sphi 0, %s112
      %s114 = sphi 0, %s112
      %s115 = sphi 0, %s114
      %s129 = sphi 0, %s115
      %s133 = sphi 0, %s133
      %s135 = sphi 0, %s133
      %s136 = sphi 0, %s135
      %s150 = sphi 0, %s136
      %s156 = sphi 0, %s158
      %s159 = sphi 0, %s156
      %s160 = sphi 0, %s159
      %s176 = sphi 0, %s160
    $region4: #{tpu_custom_call.1} parent=1 // loop_header_branch
      %18 = sbr.rel (%p16) target = $region8
    $region5: #{tpu_custom_call.1} parent=1 // loop_body
      %s20 = ssub.s32 %s15, 1
      %s21 = ssub.s32 %s15, 2
      %s22 = sadd.s32 %s15, 1
      %s23 = ssub.s32 %s15, %s22
      %p24 = scmp.eq.s32.totalorder %s23, 0
      %s26 = sadd.s32 %s25, 1
      %s27 = scalar_select %p24, %s25, %s26
      %p30 = pneg %p24
      %p31 = scmp.eq.s32.totalorder %s15, 1
      %p32 = por %p30, %p31
      %p33 = scmp.ne.s32.totalorder %s25, %s28
      %p34 = scmp.eq.s32.totalorder %s15, 0
      %p35 = por %p33, %p34
      %p36 = scmp.ne.s32.totalorder %s25, %s28
      %p37 = scmp.eq.s32.totalorder %s20, 1
      %p38 = por %p36, %p37
      %p39 = scmp.ne.s32.totalorder %s28, %s29
      %p40 = scmp.eq.s32.totalorder %s20, 0
      %p41 = por %p39, %p40
      %p42 = scmp.ne.s32.totalorder %s28, %s29
      %p43 = scmp.eq.s32.totalorder %s21, 1
      %p44 = por %p42, %p43
      %p46 = scmp.ne.s32.totalorder %s29, %s45
      %p47 = scmp.eq.s32.totalorder %s21, 0
      %p48 = por %p46, %p47
      %s50 = sadd.s32 %s49, 1
      %p53 = scmp.eq.s32.totalorder %s15, 1
      %p54 = scmp.ne.s32.totalorder %s49, %s51
      %p55 = scmp.eq.s32.totalorder %s15, 0
      %p56 = por %p54, %p55
      %p57 = scmp.ne.s32.totalorder %s49, %s51
      %p58 = scmp.eq.s32.totalorder %s20, 1
      %p59 = por %p57, %p58
      %p60 = scmp.ne.s32.totalorder %s51, %s52
      %p61 = scmp.eq.s32.totalorder %s20, 0
      %p62 = por %p60, %p61
      %p63 = scmp.ne.s32.totalorder %s51, %s52
      %p64 = scmp.eq.s32.totalorder %s21, 1
      %p65 = por %p63, %p64
      %p67 = scmp.ne.s32.totalorder %s52, %s66
      %p68 = scmp.eq.s32.totalorder %s21, 0
      %p69 = por %p67, %p68
      %s71 = sadd.s32 %s70, 1
      %p74 = scmp.eq.s32.totalorder %s15, 1
      %p75 = scmp.ne.s32.totalorder %s70, %s72
      %p76 = scmp.eq.s32.totalorder %s15, 0
      %p77 = por %p75, %p76
      %p78 = scmp.ne.s32.totalorder %s70, %s72
      %p79 = scmp.eq.s32.totalorder %s20, 1
      %p80 = por %p78, %p79
      %p81 = scmp.ne.s32.totalorder %s72, %s73
      %p82 = scmp.eq.s32.totalorder %s20, 0
      %p83 = por %p81, %p82
      %p84 = scmp.ne.s32.totalorder %s72, %s73
      %p85 = scmp.eq.s32.totalorder %s21, 1
      %p86 = por %p84, %p85
      %p88 = scmp.ne.s32.totalorder %s73, %s87
      %p89 = scmp.eq.s32.totalorder %s21, 0
      %p90 = por %p88, %p89
      %s92 = sadd.s32 %s91, 1
      %p95 = scmp.eq.s32.totalorder %s15, 1
      %p96 = scmp.ne.s32.totalorder %s91, %s93
      %p97 = scmp.eq.s32.totalorder %s15, 0
      %p98 = por %p96, %p97
      %p99 = scmp.ne.s32.totalorder %s91, %s93
      %p100 = scmp.eq.s32.totalorder %s20, 1
      %p101 = por %p99, %p100
      %p102 = scmp.ne.s32.totalorder %s93, %s94
      %p103 = scmp.eq.s32.totalorder %s20, 0
      %p104 = por %p102, %p103
      %p105 = scmp.ne.s32.totalorder %s93, %s94
      %p106 = scmp.eq.s32.totalorder %s21, 1
      %p107 = por %p105, %p106
      %p109 = scmp.ne.s32.totalorder %s94, %s108
      %p110 = scmp.eq.s32.totalorder %s21, 0
      %p111 = por %p109, %p110
      %s113 = sadd.s32 %s112, 1
      %p116 = scmp.eq.s32.totalorder %s15, 1
      %p117 = scmp.ne.s32.totalorder %s112, %s114
      %p118 = scmp.eq.s32.totalorder %s15, 0
      %p119 = por %p117, %p118
      %p120 = scmp.ne.s32.totalorder %s112, %s114
      %p121 = scmp.eq.s32.totalorder %s20, 1
      %p122 = por %p120, %p121
      %p123 = scmp.ne.s32.totalorder %s114, %s115
      %p124 = scmp.eq.s32.totalorder %s20, 0
      %p125 = por %p123, %p124
      %p126 = scmp.ne.s32.totalorder %s114, %s115
      %p127 = scmp.eq.s32.totalorder %s21, 1
      %p128 = por %p126, %p127
      %p130 = scmp.ne.s32.totalorder %s115, %s129
      %p131 = scmp.eq.s32.totalorder %s21, 0
      %p132 = por %p130, %p131
      %s134 = sadd.s32 %s133, 1
      %p137 = scmp.eq.s32.totalorder %s15, 1
      %p138 = scmp.ne.s32.totalorder %s133, %s135
      %p139 = scmp.eq.s32.totalorder %s15, 0
      %p140 = por %p138, %p139
      %p141 = scmp.ne.s32.totalorder %s133, %s135
      %p142 = scmp.eq.s32.totalorder %s20, 1
      %p143 = por %p141, %p142
      %p144 = scmp.ne.s32.totalorder %s135, %s136
      %p145 = scmp.eq.s32.totalorder %s20, 0
      %p146 = por %p144, %p145
      %p147 = scmp.ne.s32.totalorder %s135, %s136
      %p148 = scmp.eq.s32.totalorder %s21, 1
      %p149 = por %p147, %p148
      %p151 = scmp.ne.s32.totalorder %s136, %s150
      %p152 = scmp.eq.s32.totalorder %s21, 0
      %p153 = por %p151, %p152
      %s154 = ssub.s32 %s15, %s22
      %p155 = scmp.eq.s32.totalorder %s154, 0
      %s157 = sadd.s32 %s156, 1
      %s158 = scalar_select %p155, %s156, %s157
      %p161 = pneg %p155
      %p162 = scmp.eq.s32.totalorder %s15, 1
      %p163 = por %p161, %p162
      %p164 = scmp.ne.s32.totalorder %s156, %s159
      %p165 = scmp.eq.s32.totalorder %s15, 0
      %p166 = por %p164, %p165
      %p167 = scmp.ne.s32.totalorder %s156, %s159
      %p168 = scmp.eq.s32.totalorder %s20, 1
      %p169 = por %p167, %p168
      %p170 = scmp.ne.s32.totalorder %s159, %s160
      %p171 = scmp.eq.s32.totalorder %s20, 0
      %p172 = por %p170, %p171
      %p173 = scmp.ne.s32.totalorder %s159, %s160
      %p174 = scmp.eq.s32.totalorder %s21, 1
      %p175 = por %p173, %p174
      %p177 = scmp.ne.s32.totalorder %s160, %s176
      %p178 = scmp.eq.s32.totalorder %s21, 0
      %p179 = por %p177, %p178
      %p180 = scmp.le.s32.totalorder 1, %s15
      %p181 = scmp.lt.s32.totalorder %s15, 3
      %p182 = pnand %p180, %p181
      %p183 = pneg %p182
      // Predicated region
      $region9: #{tpu_custom_call.1} parent=5 // pred_check
        _
      $region10: #{tpu_custom_call.1} parent=5 // pred_check_branch
        %185 = sbr.rel (%p182) target = $region12
      $region11: #{tpu_custom_call.1} parent=5 // pred_region
        %s186 = ssub.s32 %s15, 1
        // Predicated region
        $region13: #{tpu_custom_call.1} parent=11 // pred_check
          %p187 = pneg %p62
        $region14: #{tpu_custom_call.1} parent=11 // pred_check_branch
          %189 = sbr.rel (%p187) target = $region16
        $region15: #{tpu_custom_call.1} parent=11 // pred_region
          _
        $region16: #{tpu_custom_call.1} parent=11 // pred_fallthru
          _
        // Predicated region
        $region17: #{tpu_custom_call.1} parent=11 // pred_check
          %p190 = pneg %p83
        $region18: #{tpu_custom_call.1} parent=11 // pred_check_branch
          %192 = sbr.rel (%p190) target = $region20
        $region19: #{tpu_custom_call.1} parent=11 // pred_region
          _
        $region20: #{tpu_custom_call.1} parent=11 // pred_fallthru
          _
        // Predicated region
        $region21: #{tpu_custom_call.1} parent=11 // pred_check
          %p193 = pneg %p104
        $region22: #{tpu_custom_call.1} parent=11 // pred_check_branch
          %195 = sbr.rel (%p193) target = $region24
        $region23: #{tpu_custom_call.1} parent=11 // pred_region
          _
        $region24: #{tpu_custom_call.1} parent=11 // pred_fallthru
          _
        // Predicated region
        $region25: #{tpu_custom_call.1} parent=11 // pred_check
          %p196 = pneg %p125
        $region26: #{tpu_custom_call.1} parent=11 // pred_check_branch
          %198 = sbr.rel (%p196) target = $region28
        $region27: #{tpu_custom_call.1} parent=11 // pred_region
          _
        $region28: #{tpu_custom_call.1} parent=11 // pred_fallthru
          _
        // Predicated region
        $region29: #{tpu_custom_call.1} parent=11 // pred_check
          %p199 = pneg %p146
        $region30: #{tpu_custom_call.1} parent=11 // pred_check_branch
          %201 = sbr.rel (%p199) target = $region32
        $region31: #{tpu_custom_call.1} parent=11 // pred_region
          _
        $region32: #{tpu_custom_call.1} parent=11 // pred_fallthru
          _
      $region12: #{tpu_custom_call.1} parent=5 // pred_fallthru
        _
      %p202 = scmp.lt.s32.totalorder %s15, 2
      // Predicated region
      $region33: #{tpu_custom_call.1} parent=5 // pred_check
        %p203 = pneg %p202
      $region34: #{tpu_custom_call.1} parent=5 // pred_check_branch
        %205 = sbr.rel (%p203) target = $region36
      $region35: #{tpu_custom_call.1} parent=5 // pred_region
        // Predicated region
        $region37: #{tpu_custom_call.1} parent=35 // pred_check
          %p206 = pneg %p35
        $region38: #{tpu_custom_call.1} parent=35 // pred_check_branch
          %208 = sbr.rel (%p206) target = $region40
        $region39: #{tpu_custom_call.1} parent=35 // pred_region
          %p209 = scmp.lt.s32.totalorder %s15, 1
          %s210 = scalar_select %p209, %s15, 1
          %s211 = smul.addr %s210, 8
          %s212 = scalar_lea.vmem %s0, %s211
        $region40: #{tpu_custom_call.1} parent=35 // pred_fallthru
          _
      $region36: #{tpu_custom_call.1} parent=5 // pred_fallthru
        _
      %p213 = scmp.le.s32.totalorder 1, %s15
      %p214 = scmp.lt.s32.totalorder %s15, 3
      %p215 = pnand %p213, %p214
      %p216 = pneg %p215
      // Predicated region
      $region41: #{tpu_custom_call.1} parent=5 // pred_check
        _
      $region42: #{tpu_custom_call.1} parent=5 // pred_check_branch
        %218 = sbr.rel (%p215) target = $region44
      $region43: #{tpu_custom_call.1} parent=5 // pred_region
        %s219 = ssub.s32 %s15, 1
        %p220 = scmp.lt.s32.totalorder %s20, 1
        %s221 = scalar_select %p220, %s20, 1
        %s222 = smul.addr %s221, 8
        %s223 = scalar_lea.vmem %s0, %s222
        %p224 = pneg %p41
        %p225 = pneg %p38
        %p226 = pneg %p62
        %p227 = pneg %p59
        %p228 = pneg %p83
        %p229 = pneg %p80
        %p230 = pneg %p104
        %p231 = pneg %p101
        %p232 = pneg %p125
        %p233 = pneg %p122
        %p234 = pneg %p146
        %p235 = pneg %p143
        %p236 = pneg %p172
        %p237 = pneg %p169
        %s238 = sand.u32 %s159, 1
        %s239 = scalar_lea.sflag [#allocation3], %s238
        %s240 = sand.u32 %s159, 1
        %s241 = smul.addr %s240, 8
        %s242 = scalar_lea.vmem [#allocation2], %s241
        %p243 = scmp.lt.s32.totalorder %s20, 1
        %s244 = scalar_select %p243, %s20, 1
        %s245 = smul.addr %s244, 8
        %s246 = scalar_lea.vmem %s0, %s245
        %v247 = vld [vmem:[%s246] sm:$0xff]
        %v248 = vand.u32 2147483647, %v247
        %249 = vadd.xlane.f32.xlu0 %v248
        %v250 = vpop.xlane.xlu0 %249
        %v251 = vmul.f32 %v250, 0.00390625
        %v252 = vld [vmem:[%s2] sm:$0xff]
        %v253 = vmul.f32 %v252, %v251
        %vm254 = vcmask 15360
        %v255 = vsel %vm254, %v253, 0.0
        %v256 = vrot.slane %v255, 4
        %v257 = vadd.f32 %v255, %v256
        %v258 = vrot.slane %v257, 2
        %v259 = vadd.f32 %v257, %v258
        %v260 = vrot.slane %v259, 1
        %v261 = vadd.f32 %v259, %v260
        %v262 = vld [vmem:[%s3] sm:$0x1]
        %v263 = vadd.f32 %v261, %v262
        %v264 = vmax.f32 %v263, 0.0
        %v265 = vld [vmem:[%s4] sm:$0xff]
        %v266 = vlaneseq
        %v267 = vshrl.u32 %v266, 7
        %v268 = vsub.s32 0, %v267
        %v269 = vrot.slane %v264, %v268
        %v270 = vmul.f32 %v265, %v269
        %v271 = vsel %vm254, %v270, 0.0
        %272 = vadd.xlane.f32.xlu0 %v271
        %v273 = vpop.xlane.xlu0 %272
        %v274 = vld [vmem:[%s5] sm:$0xff]
        %v275 = vadd.f32 %v273, %v274
        %v276 = vxor.u32 %v275, 2147483648
        %v277 = vmul.f32 %v276, 1.442695
        %v278 = vpow.pop %v277
        %v279 = vadd.f32 %v278, 1.0
        %v280 = vrcp.pop %v279
        %v281 = vmul.f32 1.0, %v280
        %v282 = vld [vmem:[%s1] sm:$0xff]
        %284 = vset.pattern.permute.xlu0 0
        %285 = vperm.xlu0 %284, %v282
        %v286 = vpop.permute.xlu0 %285
        %v288 = vmul.f32 %v286, %v247
        %v289 = vrot.slane %v288, 6
        %v290 = vadd.f32 %v288, %v289
        %v291 = vrot.slane %v290, 4
        %v292 = vadd.f32 %v290, %v291
        %v293 = vxor.u32 %v292, 2147483648
        %v294 = vmul.f32 %v293, 1.442695
        %v295 = vpow.pop %v294
        %v296 = vadd.f32 %v295, 1.0
        %v297 = vrcp.pop %v296
        %v298 = vmul.f32 1.0, %v297
        %v299 = vmul.f32 %v298, %v247
        %301 = vset.pattern.permute.xlu0 0
        %302 = vperm.xlu0 %301, %v281
        %v303 = vpop.permute.xlu0 %302
        %v305 = vmul.f32 %v303, %v247
        %v306 = vmax.f32 %v299, %v305
        %307 = vst [vmem:[%s242] sm:$0xff] %v306
        %s308 = sand.u32 %s159, 1
        %s309 = scalar_lea.sflag [#allocation3], %s308
        %s310 = sand.u32 %s159, 1
        %s311 = smul.addr %s310, 8
        %s312 = scalar_lea.vmem [#allocation2], %s311
        // Predicated region
        $region45: #{tpu_custom_call.1} parent=43 // pred_check
          %p313 = pneg %p169
        $region46: #{tpu_custom_call.1} parent=43 // pred_check_branch
          %315 = sbr.rel (%p313) target = $region48
        $region47: #{tpu_custom_call.1} parent=43 // pred_region
          %s317 = ssub.s32 128, 128
          %318 = vsyncadd %s309, %s317
          %s319 = smul.addr %s20, 128
          %s320 = scalar_lea.hbm %s6, %s319
          %s322 = sshll.u32 %s312, 4
          %s323 = int_to_ptr.vmem [resolvable:$true] %s322
          %325 = dma.vmem_to_hbm [thread:$0]  %s323, 128, %s320, %s309
        $region48: #{tpu_custom_call.1} parent=43 // pred_fallthru
          _
      $region44: #{tpu_custom_call.1} parent=5 // pred_fallthru
        _
      %p326 = scmp.le.s32.totalorder 2, %s15
      // Predicated region
      $region49: #{tpu_custom_call.1} parent=5 // pred_check
        %p327 = pneg %p326
      $region50: #{tpu_custom_call.1} parent=5 // pred_check_branch
        %329 = sbr.rel (%p327) target = $region52
      $region51: #{tpu_custom_call.1} parent=5 // pred_region
        %s330 = ssub.s32 %s15, 2
        // Predicated region
        $region53: #{tpu_custom_call.1} parent=51 // pred_check
          %p331 = pneg %p175
        $region54: #{tpu_custom_call.1} parent=51 // pred_check_branch
          %333 = sbr.rel (%p331) target = $region56
        $region55: #{tpu_custom_call.1} parent=51 // pred_region
          %s334 = sand.u32 %s160, 1
          %s335 = scalar_lea.sflag [#allocation3], %s334
          %s336 = sand.u32 %s160, 1
          %s337 = smul.addr %s336, 8
          %s338 = scalar_lea.vmem [#allocation2], %s337
          %339 = dma.done %s335, 128
        $region56: #{tpu_custom_call.1} parent=51 // pred_fallthru
          _
      $region52: #{tpu_custom_call.1} parent=5 // pred_fallthru
        _
    $region6: #{tpu_custom_call.1} parent=1 // loop_footer
      %s19 = sadd.s32 1, %s15
    $region7: #{tpu_custom_call.1} parent=1 // loop_footer_branch
      %14 = sbr.rel target = $region3
    $region8: #{tpu_custom_call.1} parent=1 // loop_exit
      _
    %340 = vsyncpa [#allocation3], 1
    %s341 = scalar_lea.sflag [#allocation3], 1
    %342 = vsyncpa %s341, 1

</llo_original>
